<compile_context>
chip_gen: v5e
topology: v5e:2x2
jax: 0.10.0
libtpu: 0.0.40
codegen_flags: <defaults>
</compile_context>

<pallas_src>
import jax
import jax.numpy as jnp
from jax.experimental import pallas as pl
from jax.experimental.pallas import tpu as pltpu

_LANE = 128
# Tensors smaller than this skip Pallas: launch overhead dominates and a
# standalone custom call blocks XLA fusion with neighboring ops.
_MIN_PALLAS_BYTES = 1 * 1024 * 1024


def _round_up(v: int, m: int) -> int:
    return ((v + m - 1) // m) * m


def _chip_block_config():
    """(target_block_bytes, vmem_limit_bytes) tuned per TPU generation."""
    vmem_cap = None
    try:
        vmem_cap = pltpu.get_tpu_info().vmem_capacity_bytes
    except Exception:
        vmem_cap = None
    if vmem_cap is not None and vmem_cap > 64 * 1024 * 1024:
        # v5e / v6e: 128 MiB physical VMEM -> fat 16 MiB blocks, 80 MiB cap
        # (16 in + 16 out, double-buffered = 64 MiB, well under the cap).
        return 16 * 1024 * 1024, 80 * 1024 * 1024
    # v7x (64 MiB VMEM) or unknown generation: 8 MiB blocks, 48 MiB cap
    # (8 in + 8 out, double-buffered = 32 MiB -> comfortable headroom).
    return 8 * 1024 * 1024, 48 * 1024 * 1024


def _scale_kernel(scale_ref, x_ref, o_ref):
    # scale_ref: (1, 1) float32 in SMEM; x_ref / o_ref: VMEM tiles.
    s = scale_ref[0, 0]
    o_ref[...] = (x_ref[...] * s).astype(o_ref.dtype)


def _scale_2d(x2d: jax.Array, s2d: jax.Array) -> jax.Array:
    rows, lane = x2d.shape
    itemsize = jnp.dtype(x2d.dtype).itemsize
    # Sublane packing: 8 rows for f32, 16 for bf16, 32 for int8/fp8.
    packing = max(8, 32 // max(1, itemsize))
    target_block_bytes, vmem_limit_bytes = _chip_block_config()

    cap_rows = max(
        packing, (target_block_bytes // (lane * itemsize)) // packing * packing
    )
    # Guarantee >= 2 grid steps whenever possible so the "parallel" axis can
    # shard across both TensorCores on v7x.
    half_rows = _round_up(pl.cdiv(rows, 2), packing)
    block_rows = max(packing, min(cap_rows, half_rows))
    grid = (pl.cdiv(rows, block_rows),)

    return pl.pallas_call(
        _scale_kernel,
        out_shape=jax.ShapeDtypeStruct((rows, lane), x2d.dtype),
        grid=grid,
        in_specs=[
            pl.BlockSpec(memory_space=pltpu.SMEM),               # f32 scalar
            pl.BlockSpec((block_rows, lane), lambda i: (i, 0)),  # x tile
        ],
        out_specs=pl.BlockSpec((block_rows, lane), lambda i: (i, 0)),
        compiler_params=pltpu.CompilerParams(
            dimension_semantics=("parallel",),
            vmem_limit_bytes=vmem_limit_bytes,
        ),
    )(s2d, x2d)


def scalar_scale(x: jax.Array, scalar_param, *, min_pallas_bytes=_MIN_PALLAS_BYTES):
    """Computes x * scalar_param (MyModel.forward) with the multiply in Pallas."""
    orig_shape = x.shape
    n = x.size
    s = jnp.asarray(scalar_param, dtype=jnp.float32)

    nbytes = n * jnp.dtype(x.dtype).itemsize
    if n == 0 or nbytes < min_pallas_bytes:
        # Tiny-tensor fast path: plain XLA multiply (fuses with neighbors).
        return (x * s).astype(x.dtype)

    s2d = s.reshape(1, 1)

    if n % _LANE == 0:
        # Fast path: free reshape to a lane-dense (rows, 128) slab.
        rows = n // _LANE
        out2d = _scale_2d(x.reshape(rows, _LANE), s2d)
        return out2d.reshape(orig_shape)

    # Ragged size: run Pallas on the lane-aligned prefix only and finish the
    # < 128-element tail in plain jnp (no full-array pad/slice HBM passes).
    # TODO(synk): a masked store on a 1-D ragged final block would fold the
    # tail into the same pallas_call and drop the concatenate.
    n_main = (n // _LANE) * _LANE
    x_flat = x.reshape(-1)
    head = _scale_2d(x_flat[:n_main].reshape(n_main // _LANE, _LANE), s2d)
    tail = (x_flat[n_main:] * s).astype(x.dtype)
    return jnp.concatenate([head.reshape(-1), tail]).reshape(orig_shape)


if __name__ == "__main__":
    key = jax.random.PRNGKey(0)
    k0, k1 = jax.random.split(key)

    # Parameter init matching nn.Parameter(torch.tensor(0.5)).
    scalar_param = jnp.float32(0.5)

    # Small NCHW input consistent with a typical forward: batch=2, ch=4, 16x16.
    x = jax.random.normal(k0, (2, 4, 16, 16), dtype=jnp.float32)
    ref = x * scalar_param

    # Default path: tiny tensor -> plain-XLA fast path.
    out = jax.block_until_ready(scalar_scale(x, scalar_param))
    assert out.shape == x.shape and out.dtype == x.dtype
    assert jnp.allclose(out, ref, atol=1e-6, rtol=1e-6)

    # Force the Pallas path on the same input (n % 128 == 0).
    out_pallas = jax.block_until_ready(
        scalar_scale(x, scalar_param, min_pallas_bytes=0)
    )
    assert out_pallas.shape == x.shape and out_pallas.dtype == x.dtype
    assert jnp.allclose(out_pallas, ref, atol=1e-6, rtol=1e-6)

    # Ragged element count (n % 128 != 0): prefix kernel + jnp tail.
    x_ragged = jax.random.normal(k1, (3, 5, 7, 11), dtype=jnp.float32)
    out_ragged = jax.block_until_ready(
        scalar_scale(x_ragged, scalar_param, min_pallas_bytes=0)
    )
    assert out_ragged.shape == x_ragged.shape and out_ragged.dtype == x_ragged.dtype
    assert jnp.allclose(out_ragged, x_ragged * scalar_param, atol=1e-6, rtol=1e-6)

    print("KERNEL_OK")
</pallas_src>

<mosaic_0001>
module attributes {stable_mosaic.version = 11 : i64} {
  func.func @_scale_kernel(%arg0: i32, %arg1: memref<1x1xf32, #tpu.memory_space<smem>>, %arg2: memref<8x128xf32, #tpu.memory_space<vmem>>, %arg3: memref<8x128xf32, #tpu.memory_space<vmem>>) attributes {dimension_semantics = [#tpu.dimension_semantics<parallel>], iteration_bounds = array<i64: 2>, scalar_prefetch = 0 : i64, scratch_operands = 0 : i64, tpu.core_type = #tpu.core_type<tc>, window_params = [{transform_indices = @transform_0, window_bounds = array<i64: 1, 1>}, {transform_indices = @transform_1, window_bounds = array<i64: 8, 128>}, {transform_indices = @transform_2, window_bounds = array<i64: 8, 128>}]} {
    %c0 = arith.constant 0 : index
    %c0_0 = arith.constant 0 : index
    %0 = memref.load %arg1[%c0, %c0_0] : memref<1x1xf32, #tpu.memory_space<smem>>
    %c0_1 = arith.constant 0 : index
    %c0_2 = arith.constant 0 : index
    %1 = vector.load %arg2[%c0_1, %c0_2] : memref<8x128xf32, #tpu.memory_space<vmem>>, vector<8x128xf32>
    %2 = vector.broadcast %0 : f32 to vector<8x128xf32>
    %3 = arith.mulf %1, %2 : vector<8x128xf32>
    %c0_3 = arith.constant 0 : index
    %c0_4 = arith.constant 0 : index
    %4 = vector.load %arg3[%c0_3, %c0_4] : memref<8x128xf32, #tpu.memory_space<vmem>>, vector<8x128xf32>
    tpu.vector_store %arg3[%c0_3, %c0_4], %3 {strides = array<i32>} : memref<8x128xf32, #tpu.memory_space<vmem>>, vector<8x128xf32>,
    return
  }
  func.func @transform_0(%arg0: i32) -> (i32, i32) {
    %c0_i32 = arith.constant 0 : i32
    %c0_i32_0 = arith.constant 0 : i32
    %c0_i32_1 = arith.constant 0 : i32
    return %c0_i32, %c0_i32_0 : i32, i32
  }
  func.func @transform_1(%arg0: i32) -> (i32, i32) {
    %c0_i32 = arith.constant 0 : i32
    %c0_i32_0 = arith.constant 0 : i32
    return %arg0, %c0_i32 : i32, i32
  }
  func.func @transform_2(%arg0: i32) -> (i32, i32) {
    %c0_i32 = arith.constant 0 : i32
    %c0_i32_0 = arith.constant 0 : i32
    return %arg0, %c0_i32 : i32, i32
  }
}

</mosaic_0001>

<llo_original>
// kernel: tpu_custom_call.1
$region0: #{tpu_custom_call.1}
  #allocation0 [shape = 'u32[]', space=smem, size = 0x4, offset = 0x4, fixed_abs, tag = 'smem constant byte address 0x4 - core index']
  #allocation1 [shape = 'u32[72,128]{1,0:T(1,128)}', space=vmem, size = 0x9000, scoped, tag = 'internal scratch']
  #allocation2 [shape = 'f32[1,1]{1,0:T(1,128)S(6)}', space=smem, size = 0x200, scoped, tag = 'scoped memory for tpu_custom_call.1']
  %s0 = inlined_call_operand.<no memory space> [shape: f32[1,1], index: 0, kind: input, shape index: {}]
  %s1 = inlined_call_operand.hbm [shape: f32[16,128], index: 1, kind: input, shape index: {}]
  %s2 = inlined_call_operand.hbm [shape: f32[16,128], index: 2, kind: output, shape index: {}]
  %s3 = sld [smem:[#allocation0]]
  $region45: #{tpu_custom_call.1} parent=0
    _
  %s5 = ssub.s32 1, %s3
  %s6 = scalar_select 0, %s5, %s3
  %7 = sst [smem:[#allocation2]] %s0
  $region1: #{tpu_custom_call.1} parent=0
    #allocation3 [shape = 'u8[8192]{0}', space=vmem, size = 0x2000, scoped, tag = 'input window, operand 1']
    #allocation4 [shape = 's32[2]{0}', space=sflag, size = 0x8, scoped, tag = 'scoped memory for tpu_custom_call.1']
    #allocation5 [shape = 's32[2]{0}', space=sflag, size = 0x8, scoped, tag = 'scoped memory for tpu_custom_call.1']
    #allocation6 [shape = 'u8[8192]{0}', space=vmem, size = 0x2000, scoped, tag = 'output window, operand 0']
    %8 = vsyncpa [#allocation4], 0
    %s9 = scalar_lea.sflag [#allocation4], 1
    %10 = vsyncpa %s9, 0
    %11 = vsyncpa [#allocation5], 0
    %s12 = scalar_lea.sflag [#allocation5], 1
    %13 = vsyncpa %s12, 0
    loop: start=0, step=1, limit=4
    $region2: #{tpu_custom_call.1} parent=1 // loop_pre_header
      _
    $region3: #{tpu_custom_call.1} parent=1 // loop_header
      %s15 = sphi 0, %s19
      %p16 = scmp.ge.s32.totalorder %s15, 4
      %s23 = sphi 0, %s23
      %s25 = sphi 0, %s23
      %s26 = sphi 0, %s25
      %s40 = sphi 0, %s26
      %s46 = sphi 0, %s48
      %s49 = sphi 0, %s46
      %s50 = sphi 0, %s49
      %s66 = sphi 0, %s50
      %s72 = sphi 0, %s74
      %s75 = sphi 0, %s72
      %s76 = sphi 0, %s75
      %s92 = sphi 0, %s76
    $region4: #{tpu_custom_call.1} parent=1 // loop_header_branch
      %18 = sbr.rel (%p16) target = $region8
    $region5: #{tpu_custom_call.1} parent=1 // loop_body
      %s20 = ssub.s32 %s15, 1
      %s21 = ssub.s32 %s15, 2
      %s22 = sadd.s32 %s15, 1
      %s24 = sadd.s32 %s23, 1
      %p27 = scmp.eq.s32.totalorder %s15, 1
      %p28 = scmp.ne.s32.totalorder %s23, %s25
      %p29 = scmp.eq.s32.totalorder %s15, 0
      %p30 = por %p28, %p29
      %p31 = scmp.ne.s32.totalorder %s23, %s25
      %p32 = scmp.eq.s32.totalorder %s20, 1
      %p33 = por %p31, %p32
      %p34 = scmp.ne.s32.totalorder %s25, %s26
      %p35 = scmp.eq.s32.totalorder %s20, 0
      %p36 = por %p34, %p35
      %p37 = scmp.ne.s32.totalorder %s25, %s26
      %p38 = scmp.eq.s32.totalorder %s21, 1
      %p39 = por %p37, %p38
      %p41 = scmp.ne.s32.totalorder %s26, %s40
      %p42 = scmp.eq.s32.totalorder %s21, 0
      %p43 = por %p41, %p42
      %s44 = ssub.s32 %s15, %s22
      %p45 = scmp.eq.s32.totalorder %s44, 0
      %s47 = sadd.s32 %s46, 1
      %s48 = scalar_select %p45, %s46, %s47
      %p51 = pneg %p45
      %p52 = scmp.eq.s32.totalorder %s15, 1
      %p53 = por %p51, %p52
      %p54 = scmp.ne.s32.totalorder %s46, %s49
      %p55 = scmp.eq.s32.totalorder %s15, 0
      %p56 = por %p54, %p55
      %p57 = scmp.ne.s32.totalorder %s46, %s49
      %p58 = scmp.eq.s32.totalorder %s20, 1
      %p59 = por %p57, %p58
      %p60 = scmp.ne.s32.totalorder %s49, %s50
      %p61 = scmp.eq.s32.totalorder %s20, 0
      %p62 = por %p60, %p61
      %p63 = scmp.ne.s32.totalorder %s49, %s50
      %p64 = scmp.eq.s32.totalorder %s21, 1
      %p65 = por %p63, %p64
      %p67 = scmp.ne.s32.totalorder %s50, %s66
      %p68 = scmp.eq.s32.totalorder %s21, 0
      %p69 = por %p67, %p68
      %s70 = ssub.s32 %s15, %s22
      %p71 = scmp.eq.s32.totalorder %s70, 0
      %s73 = sadd.s32 %s72, 1
      %s74 = scalar_select %p71, %s72, %s73
      %p77 = pneg %p71
      %p78 = scmp.eq.s32.totalorder %s15, 1
      %p79 = por %p77, %p78
      %p80 = scmp.ne.s32.totalorder %s72, %s75
      %p81 = scmp.eq.s32.totalorder %s15, 0
      %p82 = por %p80, %p81
      %p83 = scmp.ne.s32.totalorder %s72, %s75
      %p84 = scmp.eq.s32.totalorder %s20, 1
      %p85 = por %p83, %p84
      %p86 = scmp.ne.s32.totalorder %s75, %s76
      %p87 = scmp.eq.s32.totalorder %s20, 0
      %p88 = por %p86, %p87
      %p89 = scmp.ne.s32.totalorder %s75, %s76
      %p90 = scmp.eq.s32.totalorder %s21, 1
      %p91 = por %p89, %p90
      %p93 = scmp.ne.s32.totalorder %s76, %s92
      %p94 = scmp.eq.s32.totalorder %s21, 0
      %p95 = por %p93, %p94
      %p96 = scmp.le.s32.totalorder 1, %s15
      %p97 = scmp.lt.s32.totalorder %s15, 3
      %p98 = pnand %p96, %p97
      %p99 = pneg %p98
      // Predicated region
      $region9: #{tpu_custom_call.1} parent=5 // pred_check
        _
      $region10: #{tpu_custom_call.1} parent=5 // pred_check_branch
        %101 = sbr.rel (%p98) target = $region12
      $region11: #{tpu_custom_call.1} parent=5 // pred_region
        %s102 = ssub.s32 %s15, 1
        // Predicated region
        $region13: #{tpu_custom_call.1} parent=11 // pred_check
          %p103 = pneg %p36
        $region14: #{tpu_custom_call.1} parent=11 // pred_check_branch
          %105 = sbr.rel (%p103) target = $region16
        $region15: #{tpu_custom_call.1} parent=11 // pred_region
          _
        $region16: #{tpu_custom_call.1} parent=11 // pred_fallthru
          _
      $region12: #{tpu_custom_call.1} parent=5 // pred_fallthru
        _
      %p106 = scmp.lt.s32.totalorder %s15, 2
      // Predicated region
      $region17: #{tpu_custom_call.1} parent=5 // pred_check
        %p107 = pneg %p106
      $region18: #{tpu_custom_call.1} parent=5 // pred_check_branch
        %109 = sbr.rel (%p107) target = $region20
      $region19: #{tpu_custom_call.1} parent=5 // pred_region
        // Predicated region
        $region21: #{tpu_custom_call.1} parent=19 // pred_check
          %p110 = pneg %p56
        $region22: #{tpu_custom_call.1} parent=19 // pred_check_branch
          %112 = sbr.rel (%p110) target = $region24
        $region23: #{tpu_custom_call.1} parent=19 // pred_region
          %s113 = sand.u32 %s46, 1
          %s114 = scalar_lea.sflag [#allocation4], %s113
          %s115 = sand.u32 %s46, 1
          %s116 = smul.addr %s115, 8
          %s117 = scalar_lea.vmem [#allocation3], %s116
          %119 = vsyncadd %s114, 0
          %s120 = smul.addr %s15, 8
          %s121 = scalar_lea.hbm %s1, %s120
          %s123 = sshll.u32 %s121, 4
          %s124 = int_to_ptr.hbm [resolvable:$true] %s123
          %s125 = sshll.u32 %s117, 4
          %s126 = int_to_ptr.vmem [resolvable:$true] %s125
          %128 = dma.hbm_to_vmem [thread:$0]  %s124, 128, %s126, %s114
        $region24: #{tpu_custom_call.1} parent=19 // pred_fallthru
          _
      $region20: #{tpu_custom_call.1} parent=5 // pred_fallthru
        _
      %p129 = scmp.le.s32.totalorder 1, %s15
      %p130 = scmp.lt.s32.totalorder %s15, 3
      %p131 = pnand %p129, %p130
      %p132 = pneg %p131
      // Predicated region
      $region25: #{tpu_custom_call.1} parent=5 // pred_check
        _
      $region26: #{tpu_custom_call.1} parent=5 // pred_check_branch
        %134 = sbr.rel (%p131) target = $region28
      $region27: #{tpu_custom_call.1} parent=5 // pred_region
        %s135 = ssub.s32 %s15, 1
        %s136 = sand.u32 %s49, 1
        %s137 = scalar_lea.sflag [#allocation4], %s136
        %s138 = sand.u32 %s49, 1
        %s139 = smul.addr %s138, 8
        %s140 = scalar_lea.vmem [#allocation3], %s139
        // Predicated region
        $region29: #{tpu_custom_call.1} parent=27 // pred_check
          %p141 = pneg %p62
        $region30: #{tpu_custom_call.1} parent=27 // pred_check_branch
          %143 = sbr.rel (%p141) target = $region32
        $region31: #{tpu_custom_call.1} parent=27 // pred_region
          %145 = dma.done %s137, 128
        $region32: #{tpu_custom_call.1} parent=27 // pred_fallthru
          _
        %p146 = pneg %p36
        %p147 = pneg %p33
        %s148 = sand.u32 %s49, 1
        %s149 = scalar_lea.sflag [#allocation4], %s148
        %s150 = sand.u32 %s49, 1
        %s151 = smul.addr %s150, 8
        %s152 = scalar_lea.vmem [#allocation3], %s151
        %p153 = pneg %p62
        %p154 = pneg %p59
        %p155 = pneg %p88
        %p156 = pneg %p85
        %s157 = sand.u32 %s75, 1
        %s158 = scalar_lea.sflag [#allocation5], %s157
        %s159 = sand.u32 %s75, 1
        %s160 = smul.addr %s159, 8
        %s161 = scalar_lea.vmem [#allocation6], %s160
        %s162 = sld [smem:[#allocation2]]
        %v163 = vld [vmem:[%s140] sm:$0xff]
        %v164 = vstv %s162
        %v165 = vmul.f32 %v163, %v164
        %166 = vst [vmem:[%s161] sm:$0xff] %v165
        %s167 = sand.u32 %s75, 1
        %s168 = scalar_lea.sflag [#allocation5], %s167
        %s169 = sand.u32 %s75, 1
        %s170 = smul.addr %s169, 8
        %s171 = scalar_lea.vmem [#allocation6], %s170
        // Predicated region
        $region33: #{tpu_custom_call.1} parent=27 // pred_check
          %p172 = pneg %p85
        $region34: #{tpu_custom_call.1} parent=27 // pred_check_branch
          %174 = sbr.rel (%p172) target = $region36
        $region35: #{tpu_custom_call.1} parent=27 // pred_region
          %176 = vsyncadd %s168, 0
          %s177 = smul.addr %s20, 8
          %s178 = scalar_lea.hbm %s2, %s177
          %s180 = sshll.u32 %s171, 4
          %s181 = int_to_ptr.vmem [resolvable:$true] %s180
          %s182 = sshll.u32 %s178, 4
          %s183 = int_to_ptr.hbm [resolvable:$true] %s182
          %185 = dma.vmem_to_hbm [thread:$0]  %s181, 128, %s183, %s168
        $region36: #{tpu_custom_call.1} parent=27 // pred_fallthru
          _
      $region28: #{tpu_custom_call.1} parent=5 // pred_fallthru
        _
      %p186 = scmp.le.s32.totalorder 2, %s15
      // Predicated region
      $region37: #{tpu_custom_call.1} parent=5 // pred_check
        %p187 = pneg %p186
      $region38: #{tpu_custom_call.1} parent=5 // pred_check_branch
        %189 = sbr.rel (%p187) target = $region40
      $region39: #{tpu_custom_call.1} parent=5 // pred_region
        %s190 = ssub.s32 %s15, 2
        // Predicated region
        $region41: #{tpu_custom_call.1} parent=39 // pred_check
          %p191 = pneg %p91
        $region42: #{tpu_custom_call.1} parent=39 // pred_check_branch
          %193 = sbr.rel (%p191) target = $region44
        $region43: #{tpu_custom_call.1} parent=39 // pred_region
          %s194 = sand.u32 %s76, 1
          %s195 = scalar_lea.sflag [#allocation5], %s194
          %s196 = sand.u32 %s76, 1
          %s197 = smul.addr %s196, 8
          %s198 = scalar_lea.vmem [#allocation6], %s197
          %200 = dma.done %s195, 128
        $region44: #{tpu_custom_call.1} parent=39 // pred_fallthru
          _
      $region40: #{tpu_custom_call.1} parent=5 // pred_fallthru
        _
    $region6: #{tpu_custom_call.1} parent=1 // loop_footer
      %s19 = sadd.s32 1, %s15
    $region7: #{tpu_custom_call.1} parent=1 // loop_footer_branch
      %14 = sbr.rel target = $region3
    $region8: #{tpu_custom_call.1} parent=1 // loop_exit
      _
    %201 = vsyncpa [#allocation4], 1
    %s202 = scalar_lea.sflag [#allocation4], 1
    %203 = vsyncpa %s202, 1
    %204 = vsyncpa [#allocation5], 1
    %s205 = scalar_lea.sflag [#allocation5], 1
    %206 = vsyncpa %s205, 1

</llo_original>
